<compile_context>
chip_gen: v7x
topology: tpu7x:2x2x1
jax: 0.10.0
libtpu: 0.0.40
codegen_flags: <defaults>
</compile_context>

<pallas_src>
import numpy as np
from math import tan

import jax
import jax.numpy as jnp
from jax.experimental import pallas as pl
from jax.experimental.pallas import tpu as pltpu

# ----- sizes (small, consistent with the module's forward) -----
N_VERT = 256              # synthetic number of BFM vertices
M_ID, M_EXP = 30, 20      # PCA components kept in load_weights
N_LM = 68                 # 68 facial landmarks
N_COEF = M_ID + M_EXP + 1         # 51 = id basis + exp basis + mean
K_RAW = 3 * N_COEF                # 153 = coords x coefficients
K_BIAS = K_RAW                    # column index of the folded-bias ones column
K_PAD = 160                       # 154 -> padded to a multiple of 8
ROWS = 128                        # 68 landmarks padded to one (8,128) tile
OUT_PAD = 128                     # 4 homogeneous coords padded lane-dense


# ---------------------------------------------------------------- kernel ----
def _proj_kernel(x_ref, w_ref, o_ref):
    # One MXU pass:  Y[n, j] = image_2d.T[landmark_n, j]  (bias via ones col).
    y = jnp.dot(x_ref[...], w_ref[...], preferred_element_type=jnp.float32)
    # Fused perspective divide: EUP approximate reciprocal of the homogeneous
    # coordinate + one Newton step to stay well inside the 5e-3 tolerance.
    h = y[:, 3:4]
    r = pl.reciprocal(h, approx=True)
    r = r * (2.0 - h * r)
    o_ref[...] = y * r


def project_pallas(x, w):
    n, k = x.shape
    return pl.pallas_call(
        _proj_kernel,
        out_shape=jax.ShapeDtypeStruct((n, OUT_PAD), jnp.float32),
        grid_spec=pltpu.PrefetchScalarGridSpec(
            num_scalar_prefetch=0,
            grid=(1,),                       # single block: whole problem in VMEM
            in_specs=[
                pl.BlockSpec((n, k), lambda i: (0, 0)),
                pl.BlockSpec((k, OUT_PAD), lambda i: (0, 0)),
            ],
            out_specs=pl.BlockSpec((n, OUT_PAD), lambda i: (0, 0)),
        ),
        compiler_params=pltpu.CompilerParams(
            dimension_semantics=("arbitrary",)),
    )(x, w)


# ---------------------------------------------------------- camera matrices --
def matrix_T(rotation, translation):
    r = rotation * (jnp.pi / 180.0)
    xC, xS = jnp.cos(r[0]), jnp.sin(r[0])
    yC, yS = jnp.cos(r[1]), jnp.sin(r[1])
    zC, zS = jnp.cos(r[2]), jnp.sin(r[2])
    eye = jnp.eye(4, dtype=jnp.float32)
    T = (eye.at[0, 3].set(translation[0])
            .at[1, 3].set(translation[1])
            .at[2, 3].set(translation[2]))
    Rx = (eye.at[1, 1].set(xC).at[1, 2].set(-xS)
             .at[2, 1].set(xS).at[2, 2].set(xC))
    Ry = (eye.at[0, 0].set(yC).at[0, 2].set(yS)
             .at[2, 0].set(-yS).at[2, 2].set(yC))
    Rz = (eye.at[0, 0].set(zC).at[0, 1].set(-zS)
             .at[1, 0].set(zS).at[1, 1].set(zC))
    return Rz @ (Ry @ (Rx @ T))


def pinhole_matrices():
    n_, f_, fov, ar = 12.0, 108.0, 0.5, 1.0
    t = tan(fov / 2.0) * n_
    b = -t
    r = t * ar
    l = b
    Vp = jnp.array([[(r - l) / 2, 0, 0, (r + l) / 2],
                    [0, (t - b) / 2, 0, (t + b) / 2],
                    [0, 0, 0.5, 0.5],
                    [0, 0, 0, 1]], dtype=jnp.float32)
    P = jnp.array([[2 * n_ / (r - l), 0, (r + l) / (r - l), 0],
                   [0, 2 * n_ / (t - b), (t + b) / (t - b), 0],
                   [0, 0, -(f_ + n_) / (f_ - n_), -(2 * f_ * n_) / (f_ - n_)],
                   [0, 0, -1, 0]], dtype=jnp.float32)
    return Vp, P


# ----------------------------------------------- one-time static precompute --
def precompute_static(bfm, landmarks):
    """Build the landmark-gathered, bias-augmented X slab (depends only on the
    static BFM data + landmark indices, never on the learnable parameters)."""
    mu_id, basis_id, var_id = bfm["shape"]
    mu_exp, basis_exp, var_exp = bfm["expression"]
    # X3[n, c, m] such that  G[n, c] = sum_m X3[n, c, m] * coeff[m]
    X3 = jnp.concatenate(
        [basis_id, basis_exp, (mu_id + mu_exp)[..., None]], axis=-1)    # (N,3,51)
    X = X3.reshape(X3.shape[0], K_RAW)                                  # (N,153)
    X_lm = jnp.take(X, landmarks, axis=0)                               # (68,153)
    slab = jnp.zeros((ROWS, K_PAD), jnp.float32)
    slab = slab.at[:N_LM, :K_RAW].set(X_lm)
    # ones column (folded bias) set for ALL rows so padded rows get a finite
    # homogeneous coordinate (no inf/nan in the in-kernel reciprocal).
    slab = slab.at[:, K_BIAS].set(1.0)
    return slab, var_id, var_exp


# ---------------------------------------------------------------- forward ----
@jax.jit
def latentnet_forward(rotation, translation, alpha, delta, var_id, var_exp, x_lm):
    # coefficients: [alpha*sqrt(var_id), delta*sqrt(var_exp), 1 (for the mean)]
    coeff = jnp.concatenate([alpha * jnp.sqrt(var_id),
                             delta * jnp.sqrt(var_exp),
                             jnp.ones((1,), jnp.float32)])              # (51,)

    # full projection matrix  M4 = Vp @ P @ matT
    matT = matrix_T(rotation, translation)
    Vp, P = pinhole_matrices()
    M4 = Vp @ P @ matT                                                  # (4,4)

    # W[c*51+m, j] = coeff[m] * M4[j, c];  bias row  W[153, j] = M4[j, 3]
    w_main = (coeff[None, :, None] * M4.T[:3, None, :]).reshape(K_RAW, 4)
    w = jnp.concatenate([w_main, M4.T[3:4, :]], axis=0)                 # (154,4)
    w = jnp.pad(w, ((0, K_PAD - (K_RAW + 1)), (0, OUT_PAD - 4)))        # (160,128)

    # hot path: one MXU pass + fused perspective divide
    out = project_pallas(x_lm, w)                                       # (128,128)
    return out[:N_LM, :2]                                               # (68,2)


# --------------------------------------------------------- pure-JAX reference
def reference_forward(rotation, translation, alpha, delta, bfm, landmarks):
    mu_id, basis_id, var_id = bfm["shape"]
    mu_exp, basis_exp, var_exp = bfm["expression"]
    id_var = mu_id + jnp.matmul(basis_id, alpha * jnp.sqrt(var_id))
    exp_var = mu_exp + jnp.matmul(basis_exp, delta * jnp.sqrt(var_exp))
    G = id_var + exp_var
    G4 = jnp.concatenate([G, jnp.ones((G.shape[0], 1), jnp.float32)], axis=1)
    matT = matrix_T(rotation, translation)
    Vp, P = pinhole_matrices()
    Trans_G = matT @ G4.T
    image_2d = (Vp @ P) @ Trans_G
    pred = image_2d.T[:, :2][landmarks]
    homog = image_2d.T[landmarks][:, 3]
    return pred / homog[:, None]


# ------------------------------------------------------------------- main ----
if __name__ == "__main__":
    key = jax.random.PRNGKey(0)
    ks = jax.random.split(key, 8)

    # synthetic BFM ("bfm" dict in the original forward)
    mu_id = jax.random.normal(ks[0], (N_VERT, 3), jnp.float32) * 50.0
    basis_id = jax.random.normal(ks[1], (N_VERT, 3, M_ID), jnp.float32)
    var_id = jax.random.uniform(ks[2], (M_ID,), jnp.float32, 0.5, 2.0)
    mu_exp = jax.random.normal(ks[3], (N_VERT, 3), jnp.float32) * 5.0
    basis_exp = jax.random.normal(ks[4], (N_VERT, 3, M_EXP), jnp.float32)
    var_exp = jax.random.uniform(ks[5], (M_EXP,), jnp.float32, 0.1, 1.0)
    bfm = {"shape": (mu_id, basis_id, var_id),
           "expression": (mu_exp, basis_exp, var_exp)}

    # deterministic parameter init (the nn.Parameters of LatentNet)
    rotation = jnp.array([10.0, 20.0, 30.0], jnp.float32)
    translation = jnp.array([0.0, 0.0, -400.0], jnp.float32)
    alpha = jax.random.normal(ks[6], (M_ID,), jnp.float32)
    delta = jax.random.normal(ks[7], (M_EXP,), jnp.float32)

    # TODO(synk): Landmarks68_model2017-1_face12_nomouth.anl file is not
    # available; use deterministic synthetic landmark indices instead.
    landmarks = (jnp.arange(N_LM, dtype=jnp.int32) * 3) % N_VERT

    # one-time static precompute (BFM + landmarks only)
    x_lm, v_id, v_exp = precompute_static(bfm, landmarks)
    x_lm = jax.block_until_ready(x_lm)

    uv_2d = latentnet_forward(rotation, translation, alpha, delta,
                              v_id, v_exp, x_lm)
    uv_2d = jax.block_until_ready(uv_2d)

    ref = reference_forward(rotation, translation, alpha, delta, bfm, landmarks)
    np.testing.assert_allclose(np.asarray(uv_2d), np.asarray(ref),
                               rtol=5e-3, atol=5e-3)
    assert uv_2d.shape == (N_LM, 2) and uv_2d.dtype == jnp.float32
    print("KERNEL_OK")
</pallas_src>

<mosaic_0001>
module attributes {stable_mosaic.version = 11 : i64} {
  func.func @_proj_kernel(%arg0: i32, %arg1: memref<128x160xf32, #tpu.memory_space<vmem>>, %arg2: memref<160x128xf32, #tpu.memory_space<vmem>>, %arg3: memref<128x128xf32, #tpu.memory_space<vmem>>) attributes {dimension_semantics = [#tpu.dimension_semantics<arbitrary>], iteration_bounds = array<i64: 1>, scalar_prefetch = 0 : i64, scratch_operands = 0 : i64, tpu.core_type = #tpu.core_type<tc>, window_params = [{pipeline_mode = #tpu.pipeline_mode<synchronous>, transform_indices = @transform_0, window_bounds = array<i64: 128, 160>}, {pipeline_mode = #tpu.pipeline_mode<synchronous>, transform_indices = @transform_1, window_bounds = array<i64: 160, 128>}, {pipeline_mode = #tpu.pipeline_mode<synchronous>, transform_indices = @transform_2, window_bounds = array<i64: 128, 128>}]} {
    %c0 = arith.constant 0 : index
    %c0_0 = arith.constant 0 : index
    %0 = vector.load %arg1[%c0, %c0_0] : memref<128x160xf32, #tpu.memory_space<vmem>>, vector<128x160xf32>
    %c0_1 = arith.constant 0 : index
    %c0_2 = arith.constant 0 : index
    %1 = vector.load %arg2[%c0_1, %c0_2] : memref<160x128xf32, #tpu.memory_space<vmem>>, vector<160x128xf32>
    %cst = arith.constant dense<0.000000e+00> : vector<128x128xf32>
    %2 = tpu.matmul %0, %1, %cst {dimension_numbers = #tpu.dot_dimension_numbers<[1], [0], [0], [1], [0, 0, 1, 1], [], []>} : vector<128x160xf32>, vector<160x128xf32>, vector<128x128xf32> -> vector<128x128xf32>
    %3 = vector.extract_strided_slice %2 {offsets = [0, 3], sizes = [128, 1], strides = [1, 1]} : vector<128x128xf32> to vector<128x1xf32>
    %4 = tpu.reciprocal %3 {approx = true} : vector<128x1xf32> -> vector<128x1xf32>
    %5 = arith.mulf %3, %4 : vector<128x1xf32>
    %cst_3 = arith.constant 2.000000e+00 : f32
    %6 = vector.broadcast %cst_3 : f32 to vector<128x1xf32>
    %7 = arith.subf %6, %5 : vector<128x1xf32>
    %8 = arith.mulf %4, %7 : vector<128x1xf32>
    %9 = vector.broadcast %8 : vector<128x1xf32> to vector<128x128xf32>
    %10 = arith.mulf %2, %9 : vector<128x128xf32>
    %c0_4 = arith.constant 0 : index
    %c0_5 = arith.constant 0 : index
    %11 = vector.load %arg3[%c0_4, %c0_5] : memref<128x128xf32, #tpu.memory_space<vmem>>, vector<128x128xf32>
    tpu.vector_store %arg3[%c0_4, %c0_5], %10 {strides = array<i32>} : memref<128x128xf32, #tpu.memory_space<vmem>>, vector<128x128xf32>,
    return
  }
  func.func @transform_0(%arg0: i32) -> (i32, i32) {
    %c0_i32 = arith.constant 0 : i32
    %c0_i32_0 = arith.constant 0 : i32
    %c0_i32_1 = arith.constant 0 : i32
    return %c0_i32, %c0_i32_0 : i32, i32
  }
  func.func @transform_1(%arg0: i32) -> (i32, i32) {
    %c0_i32 = arith.constant 0 : i32
    %c0_i32_0 = arith.constant 0 : i32
    %c0_i32_1 = arith.constant 0 : i32
    return %c0_i32, %c0_i32_0 : i32, i32
  }
  func.func @transform_2(%arg0: i32) -> (i32, i32) {
    %c0_i32 = arith.constant 0 : i32
    %c0_i32_0 = arith.constant 0 : i32
    %c0_i32_1 = arith.constant 0 : i32
    return %c0_i32, %c0_i32_0 : i32, i32
  }
}

</mosaic_0001>

<llo_original>
// kernel: latentnet_forward.1
$region0: #{latentnet_forward.1}
  #allocation0 [shape = 'u32[]', space=smem, size = 0x4, offset = 0x4, fixed_abs, tag = 'smem constant byte address 0x4 - core index']
  #allocation1 [shape = 'u32[144,128]{1,0:T(1,128)}', space=vmem, size = 0x12000, scoped, tag = 'internal scratch']
  %s0 = inlined_call_operand.vmem [shape: f32[128,160], index: 0, kind: input, shape index: {}]
  %s1 = inlined_call_operand.vmem [shape: f32[160,128], index: 1, kind: input, shape index: {}]
  %s2 = inlined_call_operand.vmem [shape: f32[128,128], index: 2, kind: output, shape index: {}]
  %s3 = sld [smem:[#allocation0]]
  $region18: #{latentnet_forward.1} parent=0
    _
  %s5 = ssub.s32 1, %s3
  %s6 = scalar_select 0, %s5, %s3
  // Predicated region
  $region2: #{latentnet_forward.1} parent=0 // pred_check
    _
  $region3: #{latentnet_forward.1} parent=0 // pred_check_branch
    %8 = sbr.rel (0) target = $region5
  $region4: #{latentnet_forward.1} parent=0 // pred_region
    _
  $region5: #{latentnet_forward.1} parent=0 // pred_fallthru
    _
  // Predicated region
  $region6: #{latentnet_forward.1} parent=0 // pred_check
    _
  $region7: #{latentnet_forward.1} parent=0 // pred_check_branch
    %10 = sbr.rel (0) target = $region9
  $region8: #{latentnet_forward.1} parent=0 // pred_region
    _
  $region9: #{latentnet_forward.1} parent=0 // pred_fallthru
    _
  %v11 = vld [vmem:[%s0] sm:$0xff]
  %v12 = vld [vmem:[%s0 + $0x8] sm:$0xff]
  %v13 = vld [vmem:[%s0 + $0x10] sm:$0xff]
  %v14 = vld [vmem:[%s0 + $0x18] sm:$0xff]
  %v15 = vld [vmem:[%s0 + $0x20] sm:$0xff]
  %v16 = vld [vmem:[%s0 + $0x28] sm:$0xff]
  %v17 = vld [vmem:[%s0 + $0x30] sm:$0xff]
  %v18 = vld [vmem:[%s0 + $0x38] sm:$0xff]
  %v19 = vld [vmem:[%s0 + $0x40] sm:$0xff]
  %v20 = vld [vmem:[%s0 + $0x48] sm:$0xff]
  %v21 = vld [vmem:[%s0 + $0x50] sm:$0xff]
  %v22 = vld [vmem:[%s0 + $0x58] sm:$0xff]
  %v23 = vld [vmem:[%s0 + $0x60] sm:$0xff]
  %v24 = vld [vmem:[%s0 + $0x68] sm:$0xff]
  %v25 = vld [vmem:[%s0 + $0x70] sm:$0xff]
  %v26 = vld [vmem:[%s0 + $0x78] sm:$0xff]
  %v27 = vld [vmem:[%s0 + $0x80] sm:$0xff]
  %v28 = vld [vmem:[%s0 + $0x88] sm:$0xff]
  %v29 = vld [vmem:[%s0 + $0x90] sm:$0xff]
  %v30 = vld [vmem:[%s0 + $0x98] sm:$0xff]
  %v31 = vld [vmem:[%s0 + $0xa0] sm:$0xff]
  %v32 = vld [vmem:[%s0 + $0xa8] sm:$0xff]
  %v33 = vld [vmem:[%s0 + $0xb0] sm:$0xff]
  %v34 = vld [vmem:[%s0 + $0xb8] sm:$0xff]
  %v35 = vld [vmem:[%s0 + $0xc0] sm:$0xff]
  %v36 = vld [vmem:[%s0 + $0xc8] sm:$0xff]
  %v37 = vld [vmem:[%s0 + $0xd0] sm:$0xff]
  %v38 = vld [vmem:[%s0 + $0xd8] sm:$0xff]
  %v39 = vld [vmem:[%s0 + $0xe0] sm:$0xff]
  %v40 = vld [vmem:[%s0 + $0xe8] sm:$0xff]
  %v41 = vld [vmem:[%s0 + $0xf0] sm:$0xff]
  %v42 = vld [vmem:[%s0 + $0xf8] sm:$0xff]
  %v43 = vld [vmem:[%s1] sm:$0xff]
  %v44 = vld [vmem:[%s1 + $0x8] sm:$0xff]
  %v45 = vld [vmem:[%s1 + $0x10] sm:$0xff]
  %v46 = vld [vmem:[%s1 + $0x18] sm:$0xff]
  %v47 = vld [vmem:[%s1 + $0x20] sm:$0xff]
  %v48 = vld [vmem:[%s1 + $0x28] sm:$0xff]
  %v49 = vld [vmem:[%s1 + $0x30] sm:$0xff]
  %v50 = vld [vmem:[%s1 + $0x38] sm:$0xff]
  %v51 = vld [vmem:[%s1 + $0x40] sm:$0xff]
  %v52 = vld [vmem:[%s1 + $0x48] sm:$0xff]
  %v53 = vld [vmem:[%s1 + $0x50] sm:$0xff]
  %v54 = vld [vmem:[%s1 + $0x58] sm:$0xff]
  %v55 = vld [vmem:[%s1 + $0x60] sm:$0xff]
  %v56 = vld [vmem:[%s1 + $0x68] sm:$0xff]
  %v57 = vld [vmem:[%s1 + $0x70] sm:$0xff]
  %v58 = vld [vmem:[%s1 + $0x78] sm:$0xff]
  %v59 = vld [vmem:[%s1 + $0x80] sm:$0xff]
  %v60 = vld [vmem:[%s1 + $0x88] sm:$0xff]
  %v61 = vld [vmem:[%s1 + $0x90] sm:$0xff]
  %v62 = vld [vmem:[%s1 + $0x98] sm:$0xff]
  %vm63 = vcmask 261120
  %v65 = vsel %vm63, %v12, 0
  %v68 = vsel %vm63, %v14, 0
  %v71 = vsel %vm63, %v16, 0
  %v74 = vsel %vm63, %v18, 0
  %v77 = vsel %vm63, %v20, 0
  %v80 = vsel %vm63, %v22, 0
  %v83 = vsel %vm63, %v24, 0
  %v86 = vsel %vm63, %v26, 0
  %v89 = vsel %vm63, %v28, 0
  %v92 = vsel %vm63, %v30, 0
  %v95 = vsel %vm63, %v32, 0
  %v98 = vsel %vm63, %v34, 0
  %v101 = vsel %vm63, %v36, 0
  %v104 = vsel %vm63, %v38, 0
  %v107 = vsel %vm63, %v40, 0
  %v110 = vsel %vm63, %v42, 0
  %112 = vmatprep.subr.mxu0 0.0
  %113 = vmatpush1.msra.mxu0 %v43
  %114 = vmatprep.subr.mxu0 0.0
  %115 = vmatpush1.msra.mxu0 %v44
  %116 = vmatprep.subr.mxu0 0.0
  %117 = vmatpush1.msra.mxu0 %v45
  %118 = vmatprep.subr.mxu0 0.0
  %119 = vmatpush1.msra.mxu0 %v46
  %120 = vmatprep.subr.mxu0 0.0
  %121 = vmatpush1.msra.mxu0 %v47
  %122 = vmatprep.subr.mxu0 0.0
  %123 = vmatpush1.msra.mxu0 %v48
  %124 = vmatprep.subr.mxu0 0.0
  %125 = vmatpush1.msra.mxu0 %v49
  %126 = vmatprep.subr.mxu0 0.0
  %127 = vmatpush1.msra.mxu0 %v50
  %128 = vmatprep.subr.mxu0 0.0
  %129 = vmatpush1.msra.mxu0 %v51
  %130 = vmatprep.subr.mxu0 0.0
  %131 = vmatpush1.msra.mxu0 %v52
  %132 = vmatprep.subr.mxu0 0.0
  %133 = vmatpush1.msra.mxu0 %v53
  %134 = vmatprep.subr.mxu0 0.0
  %135 = vmatpush1.msra.mxu0 %v54
  %136 = vmatprep.subr.mxu0 0.0
  %137 = vmatpush1.msra.mxu0 %v55
  %138 = vmatprep.subr.mxu0 0.0
  %139 = vmatpush1.msra.mxu0 %v56
  %140 = vmatprep.subr.mxu0 0.0
  %141 = vmatpush1.msra.mxu0 %v57
  %142 = vmatprep.subr.mxu0 0.0
  %143 = vmatpush1.msra.mxu0 %v58
  %144 = vmatprep.subr.mxu0 0.0
  %145 = vmatpush1.msra.mxu0 %v59
  %146 = vmatprep.subr.mxu0 0.0
  %147 = vmatpush1.msra.mxu0 %v60
  %148 = vmatprep.subr.mxu0 0.0
  %149 = vmatpush1.msra.mxu0 %v61
  %150 = vmatprep.subr.mxu0 0.0
  %151 = vmatpush1.msra.mxu0 %v62
  %152 = vmatprep.subr.mxu0 0.0
  %153 = vmatpush1.msra.mxu0 0.0
  %154 = vmatprep.subr.mxu0 0.0
  %155 = vmatpush1.msra.mxu0 0.0
  %156 = vmatprep.subr.mxu0 0.0
  %157 = vmatpush1.msra.mxu0 0.0
  %158 = vmatprep.subr.mxu0 0.0
  %159 = vmatpush1.msra.mxu0 0.0
  %160 = vmatprep.subr.mxu0 0.0
  %161 = vmatpush1.msra.mxu0 0.0
  %162 = vmatprep.subr.mxu0 0.0
  %163 = vmatpush1.msra.mxu0 0.0
  %164 = vmatprep.subr.mxu0 0.0
  %165 = vmatpush1.msra.mxu0 0.0
  %166 = vmatprep.subr.mxu0 0.0
  %167 = vmatpush1.msra.mxu0 0.0
  %168 = vmatprep.subr.mxu0 0.0
  %169 = vmatpush1.msra.mxu0 0.0
  %170 = vmatprep.subr.mxu0 0.0
  %171 = vmatpush1.msra.mxu0 0.0
  %172 = vmatprep.subr.mxu0 0.0
  %173 = vmatpush1.msra.mxu0 0.0
  %174 = vmatprep.subr.mxu0 0.0
  %175 = vmatpush1.msra.mxu0 0.0
  %176 = vmatprep.mubr.f32.mxu0 %v65
  %177 = vmatmul.mubr.f32.gmra.mrb[0].mxu0 %v11
  %v178 = vpop.f32.mrb[0].mxu0
  %v179 = vadd.f32 0.0, %v178
  %v180 = vpop.f32.mrb[0].mxu0
  %181 = vmatprep.mubr.f32.mxu0 %v68
  %182 = vmatmul.mubr.f32.gmra.mrb[0].mxu0 %v13
  %v183 = vpop.f32.mrb[0].mxu0
  %v184 = vadd.f32 0.0, %v183
  %v185 = vpop.f32.mrb[0].mxu0
  %186 = vmatprep.mubr.f32.mxu0 %v71
  %187 = vmatmul.mubr.f32.gmra.mrb[0].mxu0 %v15
  %v188 = vpop.f32.mrb[0].mxu0
  %v189 = vadd.f32 0.0, %v188
  %v190 = vpop.f32.mrb[0].mxu0
  %191 = vmatprep.mubr.f32.mxu0 %v74
  %192 = vmatmul.mubr.f32.gmra.mrb[0].mxu0 %v17
  %v193 = vpop.f32.mrb[0].mxu0
  %v194 = vadd.f32 0.0, %v193
  %v195 = vpop.f32.mrb[0].mxu0
  %196 = vmatprep.mubr.f32.mxu0 %v77
  %197 = vmatmul.mubr.f32.gmra.mrb[0].mxu0 %v19
  %v198 = vpop.f32.mrb[0].mxu0
  %v199 = vadd.f32 0.0, %v198
  %v200 = vpop.f32.mrb[0].mxu0
  %201 = vmatprep.mubr.f32.mxu0 %v80
  %202 = vmatmul.mubr.f32.gmra.mrb[0].mxu0 %v21
  %v203 = vpop.f32.mrb[0].mxu0
  %v204 = vadd.f32 0.0, %v203
  %v205 = vpop.f32.mrb[0].mxu0
  %206 = vmatprep.mubr.f32.mxu0 %v83
  %207 = vmatmul.mubr.f32.gmra.mrb[0].mxu0 %v23
  %v208 = vpop.f32.mrb[0].mxu0
  %v209 = vadd.f32 0.0, %v208
  %v210 = vpop.f32.mrb[0].mxu0
  %211 = vmatprep.mubr.f32.mxu0 %v86
  %212 = vmatmul.mubr.f32.gmra.mrb[0].mxu0 %v25
  %v213 = vpop.f32.mrb[0].mxu0
  %v214 = vadd.f32 0.0, %v213
  %v215 = vpop.f32.mrb[0].mxu0
  %216 = vmatprep.mubr.f32.mxu0 %v89
  %217 = vmatmul.mubr.f32.gmra.mrb[0].mxu0 %v27
  %v218 = vpop.f32.mrb[0].mxu0
  %v219 = vadd.f32 0.0, %v218
  %v220 = vpop.f32.mrb[0].mxu0
  %221 = vmatprep.mubr.f32.mxu0 %v92
  %222 = vmatmul.mubr.f32.gmra.mrb[0].mxu0 %v29
  %v223 = vpop.f32.mrb[0].mxu0
  %v224 = vadd.f32 0.0, %v223
  %v225 = vpop.f32.mrb[0].mxu0
  %226 = vmatprep.mubr.f32.mxu0 %v95
  %227 = vmatmul.mubr.f32.gmra.mrb[0].mxu0 %v31
  %v228 = vpop.f32.mrb[0].mxu0
  %v229 = vadd.f32 0.0, %v228
  %v230 = vpop.f32.mrb[0].mxu0
  %231 = vmatprep.mubr.f32.mxu0 %v98
  %232 = vmatmul.mubr.f32.gmra.mrb[0].mxu0 %v33
  %v233 = vpop.f32.mrb[0].mxu0
  %v234 = vadd.f32 0.0, %v233
  %v235 = vpop.f32.mrb[0].mxu0
  %236 = vmatprep.mubr.f32.mxu0 %v101
  %237 = vmatmul.mubr.f32.gmra.mrb[0].mxu0 %v35
  %v238 = vpop.f32.mrb[0].mxu0
  %v239 = vadd.f32 0.0, %v238
  %v240 = vpop.f32.mrb[0].mxu0
  %241 = vmatprep.mubr.f32.mxu0 %v104
  %242 = vmatmul.mubr.f32.gmra.mrb[0].mxu0 %v37
  %v243 = vpop.f32.mrb[0].mxu0
  %v244 = vadd.f32 0.0, %v243
  %v245 = vpop.f32.mrb[0].mxu0
  %246 = vmatprep.mubr.f32.mxu0 %v107
  %247 = vmatmul.mubr.f32.gmra.mrb[0].mxu0 %v39
  %v248 = vpop.f32.mrb[0].mxu0
  %v249 = vadd.f32 0.0, %v248
  %v250 = vpop.f32.mrb[0].mxu0
  %251 = vmatprep.mubr.f32.mxu0 %v110
  %252 = vmatmul.mubr.f32.gmra.mrb[0].mxu0 %v41
  %v253 = vpop.f32.mrb[0].mxu0
  %v254 = vadd.f32 0.0, %v253
  %v255 = vpop.f32.mrb[0].mxu0
  %256 = vdwg.mxu0
  %v257 = vrcp.pop %v179
  %v258 = vrcp.pop %v184
  %v259 = vrcp.pop %v189
  %v260 = vrcp.pop %v194
  %v261 = vrcp.pop %v199
  %v262 = vrcp.pop %v204
  %v263 = vrcp.pop %v209
  %v264 = vrcp.pop %v214
  %v265 = vrcp.pop %v219
  %v266 = vrcp.pop %v224
  %v267 = vrcp.pop %v229
  %v268 = vrcp.pop %v234
  %v269 = vrcp.pop %v239
  %v270 = vrcp.pop %v244
  %v271 = vrcp.pop %v249
  %v272 = vrcp.pop %v254
  %v273 = vmul.f32 %v179, %v257
  %v274 = vmul.f32 %v184, %v258
  %v275 = vmul.f32 %v189, %v259
  %v276 = vmul.f32 %v194, %v260
  %v277 = vmul.f32 %v199, %v261
  %v278 = vmul.f32 %v204, %v262
  %v279 = vmul.f32 %v209, %v263
  %v280 = vmul.f32 %v214, %v264
  %v281 = vmul.f32 %v219, %v265
  %v282 = vmul.f32 %v224, %v266
  %v283 = vmul.f32 %v229, %v267
  %v284 = vmul.f32 %v234, %v268
  %v285 = vmul.f32 %v239, %v269
  %v286 = vmul.f32 %v244, %v270
  %v287 = vmul.f32 %v249, %v271
  %v288 = vmul.f32 %v254, %v272
  %v289 = vsub.f32 2.0, %v273
  %v290 = vsub.f32 2.0, %v274
  %v291 = vsub.f32 2.0, %v275
  %v292 = vsub.f32 2.0, %v276
  %v293 = vsub.f32 2.0, %v277
  %v294 = vsub.f32 2.0, %v278
  %v295 = vsub.f32 2.0, %v279
  %v296 = vsub.f32 2.0, %v280
  %v297 = vsub.f32 2.0, %v281
  %v298 = vsub.f32 2.0, %v282
  %v299 = vsub.f32 2.0, %v283
  %v300 = vsub.f32 2.0, %v284
  %v301 = vsub.f32 2.0, %v285
  %v302 = vsub.f32 2.0, %v286
  %v303 = vsub.f32 2.0, %v287
  %v304 = vsub.f32 2.0, %v288
  %v305 = vmul.f32 %v257, %v289
  %v306 = vmul.f32 %v258, %v290
  %v307 = vmul.f32 %v259, %v291
  %v308 = vmul.f32 %v260, %v292
  %v309 = vmul.f32 %v261, %v293
  %v310 = vmul.f32 %v262, %v294
  %v311 = vmul.f32 %v263, %v295
  %v312 = vmul.f32 %v264, %v296
  %v313 = vmul.f32 %v265, %v297
  %v314 = vmul.f32 %v266, %v298
  %v315 = vmul.f32 %v267, %v299
  %v316 = vmul.f32 %v268, %v300
  %v317 = vmul.f32 %v269, %v301
  %v318 = vmul.f32 %v270, %v302
  %v319 = vmul.f32 %v271, %v303
  %v320 = vmul.f32 %v272, %v304
  %322 = vset.pattern.permute.xlu0 3
  %323 = vperm.xlu0 %322, %v305
  %v324 = vpop.permute.xlu0 %323
  %327 = vset.pattern.permute.xlu0 3
  %328 = vperm.xlu0 %327, %v306
  %v329 = vpop.permute.xlu0 %328
  %332 = vset.pattern.permute.xlu0 3
  %333 = vperm.xlu0 %332, %v307
  %v334 = vpop.permute.xlu0 %333
  %337 = vset.pattern.permute.xlu0 3
  %338 = vperm.xlu0 %337, %v308
  %v339 = vpop.permute.xlu0 %338
  %342 = vset.pattern.permute.xlu0 3
  %343 = vperm.xlu0 %342, %v309
  %v344 = vpop.permute.xlu0 %343
  %347 = vset.pattern.permute.xlu0 3
  %348 = vperm.xlu0 %347, %v310
  %v349 = vpop.permute.xlu0 %348
  %352 = vset.pattern.permute.xlu0 3
  %353 = vperm.xlu0 %352, %v311
  %v354 = vpop.permute.xlu0 %353
  %357 = vset.pattern.permute.xlu0 3
  %358 = vperm.xlu0 %357, %v312
  %v359 = vpop.permute.xlu0 %358
  %362 = vset.pattern.permute.xlu0 3
  %363 = vperm.xlu0 %362, %v313
  %v364 = vpop.permute.xlu0 %363
  %367 = vset.pattern.permute.xlu0 3
  %368 = vperm.xlu0 %367, %v314
  %v369 = vpop.permute.xlu0 %368
  %372 = vset.pattern.permute.xlu0 3
  %373 = vperm.xlu0 %372, %v315
  %v374 = vpop.permute.xlu0 %373
  %377 = vset.pattern.permute.xlu0 3
  %378 = vperm.xlu0 %377, %v316
  %v379 = vpop.permute.xlu0 %378
  %382 = vset.pattern.permute.xlu0 3
  %383 = vperm.xlu0 %382, %v317
  %v384 = vpop.permute.xlu0 %383
  %387 = vset.pattern.permute.xlu0 3
  %388 = vperm.xlu0 %387, %v318
  %v389 = vpop.permute.xlu0 %388
  %392 = vset.pattern.permute.xlu0 3
  %393 = vperm.xlu0 %392, %v319
  %v394 = vpop.permute.xlu0 %393
  %397 = vset.pattern.permute.xlu0 3
  %398 = vperm.xlu0 %397, %v320
  %v399 = vpop.permute.xlu0 %398
  %v401 = vmul.f32 %v179, %v324
  %v402 = vmul.f32 %v184, %v329
  %v403 = vmul.f32 %v189, %v334
  %v404 = vmul.f32 %v194, %v339
  %v405 = vmul.f32 %v199, %v344
  %v406 = vmul.f32 %v204, %v349
  %v407 = vmul.f32 %v209, %v354
  %v408 = vmul.f32 %v214, %v359
  %v409 = vmul.f32 %v219, %v364
  %v410 = vmul.f32 %v224, %v369
  %v411 = vmul.f32 %v229, %v374
  %v412 = vmul.f32 %v234, %v379
  %v413 = vmul.f32 %v239, %v384
  %v414 = vmul.f32 %v244, %v389
  %v415 = vmul.f32 %v249, %v394
  %v416 = vmul.f32 %v254, %v399
  %417 = vst [vmem:[%s2] sm:$0xff] %v401
  %418 = vst [vmem:[%s2 + $0x8] sm:$0xff] %v402
  %419 = vst [vmem:[%s2 + $0x10] sm:$0xff] %v403
  %420 = vst [vmem:[%s2 + $0x18] sm:$0xff] %v404
  %421 = vst [vmem:[%s2 + $0x20] sm:$0xff] %v405
  %422 = vst [vmem:[%s2 + $0x28] sm:$0xff] %v406
  %423 = vst [vmem:[%s2 + $0x30] sm:$0xff] %v407
  %424 = vst [vmem:[%s2 + $0x38] sm:$0xff] %v408
  %425 = vst [vmem:[%s2 + $0x40] sm:$0xff] %v409
  %426 = vst [vmem:[%s2 + $0x48] sm:$0xff] %v410
  %427 = vst [vmem:[%s2 + $0x50] sm:$0xff] %v411
  %428 = vst [vmem:[%s2 + $0x58] sm:$0xff] %v412
  %429 = vst [vmem:[%s2 + $0x60] sm:$0xff] %v413
  %430 = vst [vmem:[%s2 + $0x68] sm:$0xff] %v414
  %431 = vst [vmem:[%s2 + $0x70] sm:$0xff] %v415
  %432 = vst [vmem:[%s2 + $0x78] sm:$0xff] %v416
  // Predicated region
  $region10: #{latentnet_forward.1} parent=0 // pred_check
    _
  $region11: #{latentnet_forward.1} parent=0 // pred_check_branch
    %434 = sbr.rel (0) target = $region13
  $region12: #{latentnet_forward.1} parent=0 // pred_region
    _
  $region13: #{latentnet_forward.1} parent=0 // pred_fallthru
    _
  // Predicated region
  $region14: #{latentnet_forward.1} parent=0 // pred_check
    _
  $region15: #{latentnet_forward.1} parent=0 // pred_check_branch
    %436 = sbr.rel (0) target = $region17
  $region16: #{latentnet_forward.1} parent=0 // pred_region
    _
  $region17: #{latentnet_forward.1} parent=0 // pred_fallthru
    _

</llo_original>
